<compile_context>
chip_gen: v6e
topology: v6e:2x2x1
jax: 0.10.0
libtpu: 0.0.40
codegen_flags: <defaults>
</compile_context>

<pallas_src>
import numpy as np
import jax
import jax.numpy as jnp
from jax.experimental import pallas as pl
from jax.experimental.pallas import tpu as pltpu


# ----------------------------------------------------------------------------
# Kernels
# ----------------------------------------------------------------------------

def _mean_kernel(l_ref, b_ref, r_ref, o_ref):
    o_ref[...] = (l_ref[...] + b_ref[...] + r_ref[...]) * jnp.float32(1.0 / 3.0)


def _make_fused_linear_kernel(n_pieces, d):
    """out = concat(pieces, axis=1) @ W_fold + b_fold with the concat fused.

    W_fold is the fully folded (n*d, d) matrix (attention branches:
    Wv.T @ Wo.T @ Wfc.T; concat_mlp: Wfc.T).  The concat is realised as a sum
    of per-piece MXU dots against static, sublane-aligned row blocks of the
    single stacked weight ref; the folded bias is added once at the end.
    """
    def kernel(*refs):
        pieces = refs[:n_pieces]
        w_ref, b_ref, o_ref = refs[n_pieces:]
        acc = jnp.dot(pieces[0][...], w_ref[0:d, :],
                      preferred_element_type=jnp.float32)
        for i in range(1, n_pieces):
            acc = acc + jnp.dot(pieces[i][...], w_ref[i * d:(i + 1) * d, :],
                                preferred_element_type=jnp.float32)
        o_ref[...] = acc + b_ref[...]
    return kernel


# ----------------------------------------------------------------------------
# pallas_call wrappers (row-parallel grid; whole weight/bias per grid step)
# ----------------------------------------------------------------------------

def _row_tile(n):
    if n % 8 == 0:
        for t in (512, 256, 128, 64, 32, 16, 8):
            if n % t == 0:
                return t
    return n  # fall back to a single whole-array block


def _call_fused(kernel, pieces, w, b, n_rows, dim):
    tile = _row_tile(n_rows)
    nd = w.shape[0]
    return pl.pallas_call(
        kernel,
        out_shape=jax.ShapeDtypeStruct((n_rows, dim), jnp.float32),
        grid=(n_rows // tile,),
        in_specs=[pl.BlockSpec((tile, dim), lambda i: (i, 0)) for _ in pieces]
                 + [pl.BlockSpec((nd, dim), lambda i: (0, 0)),
                    pl.BlockSpec((1, dim), lambda i: (0, 0))],
        out_specs=pl.BlockSpec((tile, dim), lambda i: (i, 0)),
        compiler_params=pltpu.CompilerParams(dimension_semantics=("parallel",)),
    )(*pieces, w, b)


def _call_mean(left, bill, right, n_rows, dim):
    tile = _row_tile(n_rows)
    return pl.pallas_call(
        _mean_kernel,
        out_shape=jax.ShapeDtypeStruct((n_rows, dim), jnp.float32),
        grid=(n_rows // tile,),
        in_specs=[pl.BlockSpec((tile, dim), lambda i: (i, 0)) for _ in range(3)],
        out_specs=pl.BlockSpec((tile, dim), lambda i: (i, 0)),
        compiler_params=pltpu.CompilerParams(dimension_semantics=("parallel",)),
    )(left, bill, right)


# ----------------------------------------------------------------------------
# Parameter construction (deterministic, synthetic)
# ----------------------------------------------------------------------------

def _xavier_normal(key, out_f, in_f):
    std = (2.0 / (in_f + out_f)) ** 0.5
    return std * jax.random.normal(key, (out_f, in_f), jnp.float32)


def _mha_params(key, embed_dim):
    k1, k2, k3, k4 = jax.random.split(key, 4)
    return dict(
        in_proj_w=0.05 * jax.random.normal(k1, (3 * embed_dim, embed_dim), jnp.float32),
        in_proj_b=0.05 * jax.random.normal(k2, (3 * embed_dim,), jnp.float32),
        out_w=0.05 * jax.random.normal(k3, (embed_dim, embed_dim), jnp.float32),
        out_b=0.05 * jax.random.normal(k4, (embed_dim,), jnp.float32),
    )


_PIECES = {
    'concat_mlp':              ('left', 'bill', 'right'),
    'concat3_self_attn_mlp':   ('left', 'bill', 'right'),
    'concat2_self_attn_mlp':   ('left', 'right'),
    'ablation_only_sponsers':  ('left', 'bill'),
    'ablation_only_subjects':  ('bill', 'right'),
    'self_attn_mean_mlp':      ('left', 'bill', 'right'),
}

_CONCAT_ATTN_TYPES = ('concat2_self_attn_mlp', 'concat3_self_attn_mlp',
                      'ablation_only_sponsers', 'ablation_only_subjects')


class FusionPallas:
    """JAX/Pallas port of the PyTorch Fusion module (all fusion_type branches).

    self.params holds the raw (torch-layout) parameters, used only by the
    pure-JAX reference.  self.kp holds the fully folded, kernel-ready arrays so
    that __call__ issues exactly one pallas_call with no JAX-side glue ops.
    """

    def __init__(self, dim, num_heads, fusion_type, key):
        self.dim = dim
        self.num_heads = num_heads
        self.fusion_type = fusion_type
        self.params = {}
        self.kp = {}
        self._kernel = None
        ks = iter(jax.random.split(key, 16))
        d = dim

        def fc(in_f):
            self.params['fc_w'] = _xavier_normal(next(ks), dim, in_f)
            self.params['fc_b'] = 0.05 * jax.random.normal(next(ks), (dim,), jnp.float32)

        if fusion_type == 'mean':
            pass

        elif fusion_type == 'concat_mlp':
            fc(dim * 3)
            self.kp['w'] = self.params['fc_w'].T                    # (3d, d)
            self.kp['b'] = self.params['fc_b'][None, :]             # (1, d)
            self._kernel = _make_fused_linear_kernel(3, d)

        elif fusion_type in _CONCAT_ATTN_TYPES:
            n = len(_PIECES[fusion_type])
            e = dim * n
            self.params['attn'] = _mha_params(next(ks), e)
            fc(e)
            a = self.params['attn']
            wv = a['in_proj_w'][2 * e:3 * e]                        # (e, e)
            bv = a['in_proj_b'][2 * e:3 * e]
            wfc_t = self.params['fc_w'].T                           # (e, d)
            # attention(x) == (x @ Wv.T + bv) @ Wo.T + bo  (softmax over 1 key)
            w_fold = wv.T @ a['out_w'].T @ wfc_t                    # (e, d)
            b_fold = (bv @ a['out_w'].T + a['out_b']) @ wfc_t + self.params['fc_b']
            self.kp['w'] = w_fold
            self.kp['b'] = b_fold[None, :]
            self._kernel = _make_fused_linear_kernel(n, d)

        elif fusion_type == 'self_attn_mean_mlp':
            self.params['left_attn'] = _mha_params(next(ks), dim)
            self.params['right_attn'] = _mha_params(next(ks), dim)
            self.params['bill_attn'] = _mha_params(next(ks), dim)
            fc(dim)
            attns = (self.params['left_attn'], self.params['bill_attn'],
                     self.params['right_attn'])                     # piece order
            wfc_t3 = self.params['fc_w'].T * jnp.float32(1.0 / 3.0)  # (d, d)
            blocks = []
            bias_acc = jnp.zeros((dim,), jnp.float32)
            for a in attns:
                wv = a['in_proj_w'][2 * d:3 * d]                    # (d, d)
                bv = a['in_proj_b'][2 * d:3 * d]
                blocks.append(wv.T @ a['out_w'].T @ wfc_t3)         # (d, d)
                bias_acc = bias_acc + (bv @ a['out_w'].T + a['out_b'])
            w_fold = jnp.concatenate(blocks, axis=0)                # (3d, d)
            b_fold = (bias_acc * jnp.float32(1.0 / 3.0)) @ self.params['fc_w'].T \
                     + self.params['fc_b']
            self.kp['w'] = w_fold
            self.kp['b'] = b_fold[None, :]
            self._kernel = _make_fused_linear_kernel(3, d)

        elif fusion_type == 'ablation_wo_both':
            fc(dim)   # exists in the torch module but is unused in forward
        else:
            raise NotImplementedError(fusion_type)

    # --- forward -------------------------------------------------------------
    def __call__(self, bill, left, right):
        ft = self.fusion_type
        n_rows = bill.shape[0]

        if ft == 'mean':
            return _call_mean(left, bill, right, n_rows, self.dim)

        if ft == 'ablation_wo_both':
            # torch forward: x = bill_embeddings; return x  (fc is not applied)
            return bill

        emb = {'bill': bill, 'left': left, 'right': right}
        pieces = tuple(emb[name] for name in _PIECES[ft])
        return _call_fused(self._kernel, pieces, self.kp['w'], self.kp['b'],
                           n_rows, self.dim)


# ----------------------------------------------------------------------------
# Pure-JAX reference (mirrors the PyTorch forward, including full MHA math
# with explicit softmax over the length-1 key axis) for correctness checking.
# ----------------------------------------------------------------------------

def _ref_mha_seq1(x, mha, num_heads):
    e = x.shape[-1]
    hd = e // num_heads
    w_in, b_in = mha['in_proj_w'], mha['in_proj_b']
    q = x @ w_in[:e].T + b_in[:e]
    k = x @ w_in[e:2 * e].T + b_in[e:2 * e]
    v = x @ w_in[2 * e:].T + b_in[2 * e:]
    n = x.shape[0]
    qh = q.reshape(n, num_heads, hd)
    kh = k.reshape(n, num_heads, hd)
    vh = v.reshape(n, num_heads, hd)
    scores = (qh * kh).sum(-1, keepdims=True) / jnp.sqrt(jnp.float32(hd))  # (N,H,1)
    w = jax.nn.softmax(scores, axis=-1)                                    # == 1.0
    attn = (w * vh).reshape(n, e)
    return attn @ mha['out_w'].T + mha['out_b']


def reference_forward(model, bill, left, right):
    ft, p, h = model.fusion_type, model.params, model.num_heads
    if ft == 'mean':
        return jnp.stack([left, bill, right], axis=-1).mean(axis=-1)
    if ft == 'concat_mlp':
        x = jnp.concatenate([left, bill, right], axis=1)
        return x @ p['fc_w'].T + p['fc_b']
    if ft in _CONCAT_ATTN_TYPES:
        if ft == 'concat3_self_attn_mlp':
            x = jnp.concatenate([left, bill, right], axis=1)
        elif ft == 'concat2_self_attn_mlp':
            x = jnp.concatenate([left, right], axis=1)
        elif ft == 'ablation_only_sponsers':
            x = jnp.concatenate([left, bill], axis=1)
        else:
            x = jnp.concatenate([bill, right], axis=1)
        a = _ref_mha_seq1(x, p['attn'], h)
        return a @ p['fc_w'].T + p['fc_b']
    if ft == 'self_attn_mean_mlp':
        la = _ref_mha_seq1(left, p['left_attn'], h)
        ba = _ref_mha_seq1(bill, p['bill_attn'], h)
        ra = _ref_mha_seq1(right, p['right_attn'], h)
        m = jnp.stack([la, ba, ra], axis=-1).mean(axis=-1)
        return m @ p['fc_w'].T + p['fc_b']
    if ft == 'ablation_wo_both':
        return bill
    raise NotImplementedError(ft)


# ----------------------------------------------------------------------------
# Main
# ----------------------------------------------------------------------------

if __name__ == "__main__":
    dim, num_heads, batch = 32, 4, 8
    key = jax.random.PRNGKey(0)
    kb, kl, kr, kp = jax.random.split(key, 4)
    bill = jax.random.normal(kb, (batch, dim), jnp.float32)
    left = jax.random.normal(kl, (batch, dim), jnp.float32)
    right = jax.random.normal(kr, (batch, dim), jnp.float32)

    fusion_types = [
        'mean', 'concat_mlp', 'concat3_self_attn_mlp', 'concat2_self_attn_mlp',
        'self_attn_mean_mlp', 'ablation_wo_both',
        'ablation_only_sponsers', 'ablation_only_subjects',
    ]

    for i, ft in enumerate(fusion_types):
        model = FusionPallas(dim, num_heads, ft, jax.random.fold_in(kp, i))
        out = model(bill, left, right)
        out = jax.block_until_ready(out)
        ref = jax.block_until_ready(reference_forward(model, bill, left, right))
        assert out.shape == ref.shape, (ft, out.shape, ref.shape)
        np.testing.assert_allclose(np.asarray(out), np.asarray(ref),
                                   rtol=2e-3, atol=2e-3)

    print("KERNEL_OK")
</pallas_src>

<mosaic_0001>
module attributes {stable_mosaic.version = 11 : i64} {
  func.func @_mean_kernel(%arg0: i32, %arg1: memref<8x32xf32, #tpu.memory_space<vmem>>, %arg2: memref<8x32xf32, #tpu.memory_space<vmem>>, %arg3: memref<8x32xf32, #tpu.memory_space<vmem>>, %arg4: memref<8x32xf32, #tpu.memory_space<vmem>>) attributes {dimension_semantics = [#tpu.dimension_semantics<parallel>], iteration_bounds = array<i64: 1>, scalar_prefetch = 0 : i64, scratch_operands = 0 : i64, tpu.core_type = #tpu.core_type<tc>, window_params = [{transform_indices = @transform_0, window_bounds = array<i64: 8, 32>}, {transform_indices = @transform_1, window_bounds = array<i64: 8, 32>}, {transform_indices = @transform_2, window_bounds = array<i64: 8, 32>}, {transform_indices = @transform_3, window_bounds = array<i64: 8, 32>}]} {
    %c0 = arith.constant 0 : index
    %c0_0 = arith.constant 0 : index
    %0 = vector.load %arg1[%c0, %c0_0] : memref<8x32xf32, #tpu.memory_space<vmem>>, vector<8x32xf32>
    %c0_1 = arith.constant 0 : index
    %c0_2 = arith.constant 0 : index
    %1 = vector.load %arg2[%c0_1, %c0_2] : memref<8x32xf32, #tpu.memory_space<vmem>>, vector<8x32xf32>
    %2 = arith.addf %0, %1 : vector<8x32xf32>
    %c0_3 = arith.constant 0 : index
    %c0_4 = arith.constant 0 : index
    %3 = vector.load %arg3[%c0_3, %c0_4] : memref<8x32xf32, #tpu.memory_space<vmem>>, vector<8x32xf32>
    %4 = arith.addf %2, %3 : vector<8x32xf32>
    %cst = arith.constant 0.333333343 : f32
    %5 = vector.broadcast %cst : f32 to vector<8x32xf32>
    %6 = arith.mulf %4, %5 : vector<8x32xf32>
    %c0_5 = arith.constant 0 : index
    %c0_6 = arith.constant 0 : index
    %7 = vector.load %arg4[%c0_5, %c0_6] : memref<8x32xf32, #tpu.memory_space<vmem>>, vector<8x32xf32>
    tpu.vector_store %arg4[%c0_5, %c0_6], %6 {strides = array<i32>} : memref<8x32xf32, #tpu.memory_space<vmem>>, vector<8x32xf32>,
    return
  }
  func.func @transform_0(%arg0: i32) -> (i32, i32) {
    %c0_i32 = arith.constant 0 : i32
    %c0_i32_0 = arith.constant 0 : i32
    return %arg0, %c0_i32 : i32, i32
  }
  func.func @transform_1(%arg0: i32) -> (i32, i32) {
    %c0_i32 = arith.constant 0 : i32
    %c0_i32_0 = arith.constant 0 : i32
    return %arg0, %c0_i32 : i32, i32
  }
  func.func @transform_2(%arg0: i32) -> (i32, i32) {
    %c0_i32 = arith.constant 0 : i32
    %c0_i32_0 = arith.constant 0 : i32
    return %arg0, %c0_i32 : i32, i32
  }
  func.func @transform_3(%arg0: i32) -> (i32, i32) {
    %c0_i32 = arith.constant 0 : i32
    %c0_i32_0 = arith.constant 0 : i32
    return %arg0, %c0_i32 : i32, i32
  }
}

</mosaic_0001>

<llo_original>
// kernel: tpu_custom_call.1
$region0: #{tpu_custom_call.1}
  #allocation0 [shape = 'u32[]', space=smem, size = 0x4, offset = 0x4, fixed_abs, tag = 'smem constant byte address 0x4 - core index']
  #allocation1 [shape = 'u32[144,128]{1,0:T(1,128)}', space=vmem, size = 0x12000, scoped, tag = 'internal scratch']
  %s0 = inlined_call_operand.hbm [shape: f32[8,32], index: 0, kind: input, shape index: {}]
  %s1 = inlined_call_operand.hbm [shape: f32[8,32], index: 1, kind: input, shape index: {}]
  %s2 = inlined_call_operand.hbm [shape: f32[8,32], index: 2, kind: input, shape index: {}]
  %s3 = inlined_call_operand.hbm [shape: f32[8,32], index: 3, kind: output, shape index: {}]
  %s4 = sld [smem:[#allocation0]]
  $region34: #{tpu_custom_call.1} parent=0
    _
  %s6 = ssub.s32 1, %s4
  %s7 = scalar_select 0, %s6, %s4
  $region1: #{tpu_custom_call.1} parent=0
    #allocation2 [shape = 'u8[4096]{0}', space=vmem, size = 0x1000, scoped, tag = 'input window, operand 0, single buffered']
    #allocation3 [shape = 's32[1]{0}', space=sflag, size = 0x4, scoped, tag = 'scoped memory for tpu_custom_call.1']
    #allocation4 [shape = 's32[1]{0}', space=sflag, size = 0x4, scoped, tag = 'scoped memory for tpu_custom_call.1']
    #allocation5 [shape = 'u8[4096]{0}', space=vmem, size = 0x1000, scoped, tag = 'input window, operand 1, single buffered']
    #allocation6 [shape = 's32[1]{0}', space=sflag, size = 0x4, scoped, tag = 'scoped memory for tpu_custom_call.1']
    #allocation7 [shape = 'u8[4096]{0}', space=vmem, size = 0x1000, scoped, tag = 'input window, operand 2, single buffered']
    #allocation8 [shape = 'u8[4096]{0}', space=vmem, size = 0x1000, scoped, tag = 'output window, operand 0, single buffered']
    %8 = vsyncpa [#allocation3], 0
    %9 = vsyncpa [#allocation6], 0
    %10 = vsyncpa [#allocation4], 0
    // Predicated region
    $region2: #{tpu_custom_call.1} parent=1 // pred_check
      _
    $region3: #{tpu_custom_call.1} parent=1 // pred_check_branch
      %12 = sbr.rel (0) target = $region5
    $region4: #{tpu_custom_call.1} parent=1 // pred_region
      %s14 = ssub.s32 128, 128
      %15 = vsyncadd [#allocation3], %s14
      %s17 = sshll.u32 [#allocation2], 4
      %s18 = int_to_ptr.vmem [resolvable:$true] %s17
      %20 = dma.hbm_to_vmem [thread:$0]  %s0, 128, %s18, [#allocation3]
    $region5: #{tpu_custom_call.1} parent=1 // pred_fallthru
      _
    // Predicated region
    $region6: #{tpu_custom_call.1} parent=1 // pred_check
      _
    $region7: #{tpu_custom_call.1} parent=1 // pred_check_branch
      %22 = sbr.rel (0) target = $region9
    $region8: #{tpu_custom_call.1} parent=1 // pred_region
      %s24 = ssub.s32 128, 128
      %25 = vsyncadd [#allocation6], %s24
      %s27 = sshll.u32 [#allocation5], 4
      %s28 = int_to_ptr.vmem [resolvable:$true] %s27
      %30 = dma.hbm_to_vmem [thread:$0]  %s1, 128, %s28, [#allocation6]
    $region9: #{tpu_custom_call.1} parent=1 // pred_fallthru
      _
    // Predicated region
    $region10: #{tpu_custom_call.1} parent=1 // pred_check
      _
    $region11: #{tpu_custom_call.1} parent=1 // pred_check_branch
      %32 = sbr.rel (0) target = $region13
    $region12: #{tpu_custom_call.1} parent=1 // pred_region
      %s34 = ssub.s32 128, 128
      %35 = vsyncadd [#allocation6], %s34
      %s37 = sshll.u32 [#allocation7], 4
      %s38 = int_to_ptr.vmem [resolvable:$true] %s37
      %40 = dma.hbm_to_vmem [thread:$0]  %s2, 128, %s38, [#allocation6]
    $region13: #{tpu_custom_call.1} parent=1 // pred_fallthru
      _
    // Predicated region
    $region14: #{tpu_custom_call.1} parent=1 // pred_check
      _
    $region15: #{tpu_custom_call.1} parent=1 // pred_check_branch
      %42 = sbr.rel (0) target = $region17
    $region16: #{tpu_custom_call.1} parent=1 // pred_region
      %43 = dma.done [#allocation3], 128
    $region17: #{tpu_custom_call.1} parent=1 // pred_fallthru
      _
    // Predicated region
    $region18: #{tpu_custom_call.1} parent=1 // pred_check
      _
    $region19: #{tpu_custom_call.1} parent=1 // pred_check_branch
      %45 = sbr.rel (0) target = $region21
    $region20: #{tpu_custom_call.1} parent=1 // pred_region
      %46 = dma.done [#allocation6], 128
    $region21: #{tpu_custom_call.1} parent=1 // pred_fallthru
      _
    // Predicated region
    $region22: #{tpu_custom_call.1} parent=1 // pred_check
      _
    $region23: #{tpu_custom_call.1} parent=1 // pred_check_branch
      %48 = sbr.rel (0) target = $region25
    $region24: #{tpu_custom_call.1} parent=1 // pred_region
      %49 = dma.done [#allocation6], 128
    $region25: #{tpu_custom_call.1} parent=1 // pred_fallthru
      _
    %v50 = vld [vmem:[#allocation2] sm:$0xff]
    %v51 = vld [vmem:[#allocation5] sm:$0xff]
    %v52 = vadd.f32 %v50, %v51
    %v53 = vld [vmem:[#allocation7] sm:$0xff]
    %v54 = vadd.f32 %v52, %v53
    %v55 = vmul.f32 %v54, 0.33333334
    %vm56 = vcmask 261120
    %57 = vst.msk [vmem:[#allocation8] sm:$0xff] %vm56, %v55
    // Predicated region
    $region26: #{tpu_custom_call.1} parent=1 // pred_check
      _
    $region27: #{tpu_custom_call.1} parent=1 // pred_check_branch
      %59 = sbr.rel (0) target = $region29
    $region28: #{tpu_custom_call.1} parent=1 // pred_region
      %s61 = ssub.s32 128, 128
      %62 = vsyncadd [#allocation4], %s61
      %s64 = sshll.u32 [#allocation8], 4
      %s65 = int_to_ptr.vmem [resolvable:$true] %s64
      %67 = dma.vmem_to_hbm [thread:$0]  %s65, 128, %s3, [#allocation4]
    $region29: #{tpu_custom_call.1} parent=1 // pred_fallthru
      _
    // Predicated region
    $region30: #{tpu_custom_call.1} parent=1 // pred_check
      _
    $region31: #{tpu_custom_call.1} parent=1 // pred_check_branch
      %69 = sbr.rel (0) target = $region33
    $region32: #{tpu_custom_call.1} parent=1 // pred_region
      %70 = dma.done [#allocation4], 128
    $region33: #{tpu_custom_call.1} parent=1 // pred_fallthru
      _
    %71 = vsyncpa [#allocation3], 1
    %72 = vsyncpa [#allocation6], 1
    %73 = vsyncpa [#allocation4], 1

</llo_original>
